<compile_context>
chip_gen: v7x
topology: tpu7x:2x2x1
jax: 0.10.0
libtpu: 0.0.40
codegen_flags: <defaults>
</compile_context>

<pallas_src>
import jax
import jax.numpy as jnp
from jax.experimental import pallas as pl
from jax.experimental.pallas import tpu as pltpu


def _cdiv(a, b):
    return -(-a // b)


def _token_mixing_kernel(x_ref, w_ref, b_ref, o_ref):
    # x_ref: (1, slab_rows, lane)   w_ref: (1, lane, lane) bf16
    # b_ref: (1, 1, lane) f32       o_ref: (1, slab_rows, lane)
    xs = x_ref[0]                                            # (slab_rows, lane)
    acc = jnp.dot(xs.astype(jnp.bfloat16), w_ref[0],
                  preferred_element_type=jnp.float32)        # (slab_rows, lane)
    o_ref[0] = (acc + b_ref[0]).astype(o_ref.dtype)


def token_mixing(x, adapt_input, params, *, max_slab_rows=1024, out_dtype=None):
    """x: [B, S, D], adapt_input: [B, A] -> [B, S, D] (out_dtype, default x.dtype)."""
    B, S, D = x.shape
    A = adapt_input.shape[1]
    f32 = jnp.float32
    out_dtype = x.dtype if out_dtype is None else out_dtype

    # Pack several tokens into one 128-lane slab row when possible (lane-dense I/O).
    # Fallback (pack=1) is correct but uses masked / narrower stores.
    pack = 128 // D if (D <= 128 and 128 % D == 0) else 1
    lane = pack * D

    # Pad S only to `pack` granularity (at most pack-1 tokens).
    n_slab = _cdiv(S, pack)
    s_pad = n_slab * pack
    if s_pad != S:
        x = jnp.pad(x, ((0, 0), (0, s_pad - S), (0, 0)))
    x_slab = x.reshape(B, n_slab, lane)                       # free reshape (view)

    # Sequence tiling in units of slab rows.  Either the tile covers the whole
    # sequence (block dim == full array dim) or it is a sublane-aligned 1024;
    # the last tile may be partial -- Pallas masks the edge stores.
    if n_slab <= max_slab_rows:
        slab_rows = n_slab
    else:
        slab_rows = (max_slab_rows // 8) * 8
    n_tiles = _cdiv(n_slab, slab_rows)

    # ---- per-batch effective weight / bias (tiny; plain XLA in the wrapper) ----
    W = params["W"].astype(f32)            # (D, D)   static weight [out, in]
    Waw = params["Waw"].astype(f32)        # (D*D, A) adapt_weight Linear weight
    baw = params["baw"].astype(f32)        # (D*D,)   adapt_weight Linear bias
    Wab = params["Wab"].astype(f32)        # (D, A)   adapt_bias Linear weight
    bab = params["bab"].astype(f32)        # (D,)     adapt_bias Linear bias
    ad = adapt_input.astype(f32)           # (B, A)

    aw = (ad @ Waw.T).reshape(B, D, D)                         # (B, out, in)
    w_eff_T = jnp.swapaxes(W[None] + baw.reshape(1, D, D) + aw, 1, 2)  # (B, in, out)
    # Block-diagonal replication so `pack` tokens share one 128-lane slab row:
    #   W8[b, t*D+i, t'*D+o] = delta(t, t') * w_eff_T[b, i, o]
    eye_p = jnp.eye(pack, dtype=f32)
    w8 = jnp.einsum("pq,bio->bpiqo", eye_p, w_eff_T).reshape(B, lane, lane)
    w8 = w8.astype(jnp.bfloat16)                               # bf16 MXU operand

    ab = ad @ Wab.T + bab                                      # (B, D)
    ab8 = jnp.tile(ab, (1, pack)).reshape(B, 1, lane).astype(f32)

    out_slab = pl.pallas_call(
        _token_mixing_kernel,
        out_shape=jax.ShapeDtypeStruct((B, n_slab, lane), out_dtype),
        grid_spec=pltpu.PrefetchScalarGridSpec(
            num_scalar_prefetch=0,
            grid=(B, n_tiles),
            in_specs=[
                pl.BlockSpec((1, slab_rows, lane), lambda b, j: (b, j, 0)),  # x slabs
                pl.BlockSpec((1, lane, lane), lambda b, j: (b, 0, 0)),       # W8[b]
                pl.BlockSpec((1, 1, lane), lambda b, j: (b, 0, 0)),          # ab8[b]
            ],
            out_specs=pl.BlockSpec((1, slab_rows, lane), lambda b, j: (b, j, 0)),
        ),
        compiler_params=pltpu.CompilerParams(
            dimension_semantics=("parallel", "parallel")),
    )(x_slab, w8, ab8)

    out = out_slab.reshape(B, s_pad, D)
    if s_pad != S:
        out = out[:, :S, :]
    return out


def token_mixing_reference(x, adapt_input, params):
    """Pure-JAX reference mirroring the PyTorch forward exactly (f32)."""
    B, S, D = x.shape
    A = adapt_input.shape[1]
    N = B * S
    xf = x.reshape(N, D)
    af = jnp.broadcast_to(adapt_input[:, None, :], (B, S, A)).reshape(N, A)
    aw = (af @ params["Waw"].T + params["baw"]).reshape(N, D, D)   # [N, out, in]
    ab = af @ params["Wab"].T + params["bab"]                      # [N, out]
    w = params["W"][None] + aw                                     # [N, out, in]
    out = jnp.einsum("ni,noi->no", xf, w) + ab
    return out.reshape(B, S, D)


if __name__ == "__main__":
    B, S, D, A = 2, 8, 16, 32   # batch, seq_length, token_dim, adapt_dim

    key = jax.random.PRNGKey(0)
    kx, ka, k1, k2, k3, k4, k5 = jax.random.split(key, 7)

    x = jax.random.normal(kx, (B, S, D), dtype=jnp.float32)
    adapt_input = jax.random.normal(ka, (B, A), dtype=jnp.float32)

    # Shapes follow AdaptiveLinear.__init__.
    params = {
        "W":   jax.random.normal(k1, (D, D), dtype=jnp.float32),             # static weight [out, in]
        "Waw": jax.random.normal(k2, (D * D, A), dtype=jnp.float32) * 0.05,  # adapt_weight Linear weight
        "baw": jax.random.normal(k3, (D * D,), dtype=jnp.float32) * 0.05,    # adapt_weight Linear bias
        "Wab": jax.random.normal(k4, (D, A), dtype=jnp.float32) * 0.05,      # adapt_bias Linear weight
        "bab": jax.random.normal(k5, (D,), dtype=jnp.float32) * 0.05,        # adapt_bias Linear bias
        # NOTE: AdaptiveLinear.bias (static) is unused in the torch forward, so omitted.
    }

    out = token_mixing(x, adapt_input, params)
    out = jax.block_until_ready(out)

    ref = token_mixing_reference(x, adapt_input, params)
    assert out.shape == (B, S, D)
    # bf16 MXU operands (f32 accumulation) -> loosened tolerance vs f32 reference.
    assert jnp.allclose(out, ref, atol=1e-1, rtol=2e-2), "mismatch vs reference"

    print("KERNEL_OK")
</pallas_src>

<mosaic_0001>
module attributes {stable_mosaic.version = 11 : i64} {
  func.func @_token_mixing_kernel(%arg0: i32, %arg1: i32, %arg2: memref<1x1x128xf32, #tpu.memory_space<vmem>>, %arg3: memref<1x128x128xbf16, #tpu.memory_space<vmem>>, %arg4: memref<1x1x128xf32, #tpu.memory_space<vmem>>, %arg5: memref<1x1x128xf32, #tpu.memory_space<vmem>>) attributes {dimension_semantics = [#tpu.dimension_semantics<parallel>, #tpu.dimension_semantics<parallel>], iteration_bounds = array<i64: 2, 1>, scalar_prefetch = 0 : i64, scratch_operands = 0 : i64, tpu.core_type = #tpu.core_type<tc>, window_params = [{transform_indices = @transform_0, window_bounds = array<i64: 1, 1, 128>}, {transform_indices = @transform_1, window_bounds = array<i64: 1, 128, 128>}, {transform_indices = @transform_2, window_bounds = array<i64: 1, 1, 128>}, {transform_indices = @transform_3, window_bounds = array<i64: 1, 1, 128>}]} {
    %c0 = arith.constant 0 : index
    %c0_0 = arith.constant 0 : index
    %c0_1 = arith.constant 0 : index
    %0 = vector.load %arg2[%c0, %c0_0, %c0_1] : memref<1x1x128xf32, #tpu.memory_space<vmem>>, vector<1x1x128xf32>
    %1 = vector.shape_cast %0 : vector<1x1x128xf32> to vector<1x128xf32>
    %2 = arith.truncf %1 : vector<1x128xf32> to vector<1x128xbf16>
    %c0_2 = arith.constant 0 : index
    %c0_3 = arith.constant 0 : index
    %c0_4 = arith.constant 0 : index
    %3 = vector.load %arg3[%c0_2, %c0_3, %c0_4] : memref<1x128x128xbf16, #tpu.memory_space<vmem>>, vector<1x128x128xbf16>
    %4 = vector.shape_cast %3 : vector<1x128x128xbf16> to vector<128x128xbf16>
    %cst = arith.constant dense<0.000000e+00> : vector<1x128xf32>
    %5 = tpu.matmul %2, %4, %cst {dimension_numbers = #tpu.dot_dimension_numbers<[1], [0], [0], [1], [0, 0, 1, 1], [], []>} : vector<1x128xbf16>, vector<128x128xbf16>, vector<1x128xf32> -> vector<1x128xf32>
    %c0_5 = arith.constant 0 : index
    %c0_6 = arith.constant 0 : index
    %c0_7 = arith.constant 0 : index
    %6 = vector.load %arg4[%c0_5, %c0_6, %c0_7] : memref<1x1x128xf32, #tpu.memory_space<vmem>>, vector<1x1x128xf32>
    %7 = vector.shape_cast %6 : vector<1x1x128xf32> to vector<1x128xf32>
    %8 = arith.addf %5, %7 : vector<1x128xf32>
    %c0_8 = arith.constant 0 : index
    %c0_9 = arith.constant 0 : index
    %c0_10 = arith.constant 0 : index
    %9 = vector.load %arg5[%c0_8, %c0_9, %c0_10] : memref<1x1x128xf32, #tpu.memory_space<vmem>>, vector<1x1x128xf32>
    %10 = vector.shape_cast %9 : vector<1x1x128xf32> to vector<1x128xf32>
    %11 = vector.shape_cast %8 : vector<1x128xf32> to vector<1x1x128xf32>
    tpu.vector_store %arg5[%c0_8, %c0_9, %c0_10], %11 {strides = array<i32>} : memref<1x1x128xf32, #tpu.memory_space<vmem>>, vector<1x1x128xf32>,
    return
  }
  func.func @transform_0(%arg0: i32, %arg1: i32) -> (i32, i32, i32) {
    %c0_i32 = arith.constant 0 : i32
    %c0_i32_0 = arith.constant 0 : i32
    return %arg0, %arg1, %c0_i32 : i32, i32, i32
  }
  func.func @transform_1(%arg0: i32, %arg1: i32) -> (i32, i32, i32) {
    %c0_i32 = arith.constant 0 : i32
    %c0_i32_0 = arith.constant 0 : i32
    %c0_i32_1 = arith.constant 0 : i32
    return %arg0, %c0_i32, %c0_i32_0 : i32, i32, i32
  }
  func.func @transform_2(%arg0: i32, %arg1: i32) -> (i32, i32, i32) {
    %c0_i32 = arith.constant 0 : i32
    %c0_i32_0 = arith.constant 0 : i32
    %c0_i32_1 = arith.constant 0 : i32
    return %arg0, %c0_i32, %c0_i32_0 : i32, i32, i32
  }
  func.func @transform_3(%arg0: i32, %arg1: i32) -> (i32, i32, i32) {
    %c0_i32 = arith.constant 0 : i32
    %c0_i32_0 = arith.constant 0 : i32
    return %arg0, %arg1, %c0_i32 : i32, i32, i32
  }
}

</mosaic_0001>

<llo_original>
// kernel: tpu_custom_call.1
$region0: #{tpu_custom_call.1}
  #allocation0 [shape = 'u32[]', space=smem, size = 0x4, offset = 0x4, fixed_abs, tag = 'smem constant byte address 0x4 - core index']
  #allocation1 [shape = 'u32[144,128]{1,0:T(1,128)}', space=vmem, size = 0x12000, scoped, tag = 'internal scratch']
  %s0 = inlined_call_operand.hbm [shape: f32[2,1,128], index: 0, kind: input, shape index: {}]
  %s1 = inlined_call_operand.hbm [shape: bf16[2,128,128], index: 1, kind: input, shape index: {}]
  %s2 = inlined_call_operand.vmem [shape: f32[2,1,128], index: 2, kind: input, shape index: {}]
  %s3 = inlined_call_operand.hbm [shape: f32[2,1,128], index: 3, kind: output, shape index: {}]
  %s4 = sld [smem:[#allocation0]]
  $region53: #{tpu_custom_call.1} parent=0
    _
  %s6 = ssub.s32 1, %s4
  %s7 = scalar_select 0, %s6, %s4
  $region1: #{tpu_custom_call.1} parent=0
    #allocation2 [shape = 'u8[1024]{0}', space=vmem, size = 0x400, scoped, tag = 'input window, operand 0']
    #allocation3 [shape = 's32[2]{0}', space=sflag, size = 0x8, scoped, tag = 'scoped memory for tpu_custom_call.1']
    #allocation4 [shape = 's32[2]{0}', space=sflag, size = 0x8, scoped, tag = 'scoped memory for tpu_custom_call.1']
    #allocation5 [shape = 'u8[65536]{0}', space=vmem, size = 0x10000, scoped, tag = 'input window, operand 1']
    #allocation6 [shape = 's32[2]{0}', space=sflag, size = 0x8, scoped, tag = 'scoped memory for tpu_custom_call.1']
    #allocation7 [shape = 'u8[1024]{0}', space=vmem, size = 0x400, scoped, tag = 'output window, operand 0']
    %8 = vsyncpa [#allocation3], 0
    %s9 = scalar_lea.sflag [#allocation3], 1
    %10 = vsyncpa %s9, 0
    %11 = vsyncpa [#allocation6], 0
    %s12 = scalar_lea.sflag [#allocation6], 1
    %13 = vsyncpa %s12, 0
    %14 = vsyncpa [#allocation4], 0
    %s15 = scalar_lea.sflag [#allocation4], 1
    %16 = vsyncpa %s15, 0
    loop: start=0, step=1, limit=4
    $region2: #{tpu_custom_call.1} parent=1 // loop_pre_header
      _
    $region3: #{tpu_custom_call.1} parent=1 // loop_header
      %s18 = sphi 0, %s22
      %p19 = scmp.ge.s32.totalorder %s18, 4
      %s25 = sphi 0, %s37
      %s26 = sphi 0, %s33
      %s27 = sphi 0, %s25
      %s28 = sphi 0, %s26
      %s29 = sphi 0, %s27
      %s30 = sphi 0, %s28
      %s42 = sphi 0, %s44
      %s45 = sphi 0, %s42
      %s46 = sphi 0, %s45
      %s62 = sphi 0, %s46
      %s68 = sphi 0, %s70
      %s71 = sphi 0, %s68
      %s72 = sphi 0, %s71
      %s88 = sphi 0, %s72
      %s94 = sphi 0, %s96
      %s97 = sphi 0, %s94
      %s98 = sphi 0, %s97
      %s114 = sphi 0, %s98
      %s122 = sphi 0, %s124
      %s125 = sphi 0, %s122
      %s126 = sphi 0, %s125
      %s142 = sphi 0, %s126
    $region4: #{tpu_custom_call.1} parent=1 // loop_header_branch
      %21 = sbr.rel (%p19) target = $region8
    $region5: #{tpu_custom_call.1} parent=1 // loop_body
      %s23 = ssub.s32 %s18, 1
      %s24 = ssub.s32 %s18, 2
      %s31 = sadd.s32 1, %s26
      %p32 = scmp.ge.s32.totalorder %s31, 1
      %s33 = scalar_select %p32, 0, %s31
      %s34 = sadd.s32 1, %s25
      %s35 = scalar_select %p32, %s34, %s25
      %p36 = scmp.ge.s32.totalorder %s35, 2
      %s37 = scalar_select %p36, 0, %s35
      %s38 = ssub.s32 %s25, %s37
      %s39 = ssub.s32 %s26, %s33
      %s40 = sor.u32 %s38, %s39
      %p41 = scmp.eq.s32.totalorder %s40, 0
      %s43 = sadd.s32 %s42, 1
      %s44 = scalar_select %p41, %s42, %s43
      %p47 = pneg %p41
      %p48 = scmp.eq.s32.totalorder %s18, 1
      %p49 = por %p47, %p48
      %p50 = scmp.ne.s32.totalorder %s42, %s45
      %p51 = scmp.eq.s32.totalorder %s18, 0
      %p52 = por %p50, %p51
      %p53 = scmp.ne.s32.totalorder %s42, %s45
      %p54 = scmp.eq.s32.totalorder %s23, 1
      %p55 = por %p53, %p54
      %p56 = scmp.ne.s32.totalorder %s45, %s46
      %p57 = scmp.eq.s32.totalorder %s23, 0
      %p58 = por %p56, %p57
      %p59 = scmp.ne.s32.totalorder %s45, %s46
      %p60 = scmp.eq.s32.totalorder %s24, 1
      %p61 = por %p59, %p60
      %p63 = scmp.ne.s32.totalorder %s46, %s62
      %p64 = scmp.eq.s32.totalorder %s24, 0
      %p65 = por %p63, %p64
      %s66 = ssub.s32 %s25, %s37
      %p67 = scmp.eq.s32.totalorder %s66, 0
      %s69 = sadd.s32 %s68, 1
      %s70 = scalar_select %p67, %s68, %s69
      %p73 = pneg %p67
      %p74 = scmp.eq.s32.totalorder %s18, 1
      %p75 = por %p73, %p74
      %p76 = scmp.ne.s32.totalorder %s68, %s71
      %p77 = scmp.eq.s32.totalorder %s18, 0
      %p78 = por %p76, %p77
      %p79 = scmp.ne.s32.totalorder %s68, %s71
      %p80 = scmp.eq.s32.totalorder %s23, 1
      %p81 = por %p79, %p80
      %p82 = scmp.ne.s32.totalorder %s71, %s72
      %p83 = scmp.eq.s32.totalorder %s23, 0
      %p84 = por %p82, %p83
      %p85 = scmp.ne.s32.totalorder %s71, %s72
      %p86 = scmp.eq.s32.totalorder %s24, 1
      %p87 = por %p85, %p86
      %p89 = scmp.ne.s32.totalorder %s72, %s88
      %p90 = scmp.eq.s32.totalorder %s24, 0
      %p91 = por %p89, %p90
      %s92 = ssub.s32 %s25, %s37
      %p93 = scmp.eq.s32.totalorder %s92, 0
      %s95 = sadd.s32 %s94, 1
      %s96 = scalar_select %p93, %s94, %s95
      %p99 = pneg %p93
      %p100 = scmp.eq.s32.totalorder %s18, 1
      %p101 = por %p99, %p100
      %p102 = scmp.ne.s32.totalorder %s94, %s97
      %p103 = scmp.eq.s32.totalorder %s18, 0
      %p104 = por %p102, %p103
      %p105 = scmp.ne.s32.totalorder %s94, %s97
      %p106 = scmp.eq.s32.totalorder %s23, 1
      %p107 = por %p105, %p106
      %p108 = scmp.ne.s32.totalorder %s97, %s98
      %p109 = scmp.eq.s32.totalorder %s23, 0
      %p110 = por %p108, %p109
      %p111 = scmp.ne.s32.totalorder %s97, %s98
      %p112 = scmp.eq.s32.totalorder %s24, 1
      %p113 = por %p111, %p112
      %p115 = scmp.ne.s32.totalorder %s98, %s114
      %p116 = scmp.eq.s32.totalorder %s24, 0
      %p117 = por %p115, %p116
      %s118 = ssub.s32 %s25, %s37
      %s119 = ssub.s32 %s26, %s33
      %s120 = sor.u32 %s118, %s119
      %p121 = scmp.eq.s32.totalorder %s120, 0
      %s123 = sadd.s32 %s122, 1
      %s124 = scalar_select %p121, %s122, %s123
      %p127 = pneg %p121
      %p128 = scmp.eq.s32.totalorder %s18, 1
      %p129 = por %p127, %p128
      %p130 = scmp.ne.s32.totalorder %s122, %s125
      %p131 = scmp.eq.s32.totalorder %s18, 0
      %p132 = por %p130, %p131
      %p133 = scmp.ne.s32.totalorder %s122, %s125
      %p134 = scmp.eq.s32.totalorder %s23, 1
      %p135 = por %p133, %p134
      %p136 = scmp.ne.s32.totalorder %s125, %s126
      %p137 = scmp.eq.s32.totalorder %s23, 0
      %p138 = por %p136, %p137
      %p139 = scmp.ne.s32.totalorder %s125, %s126
      %p140 = scmp.eq.s32.totalorder %s24, 1
      %p141 = por %p139, %p140
      %p143 = scmp.ne.s32.totalorder %s126, %s142
      %p144 = scmp.eq.s32.totalorder %s24, 0
      %p145 = por %p143, %p144
      %p146 = scmp.le.s32.totalorder 1, %s18
      %p147 = scmp.lt.s32.totalorder %s18, 3
      %p148 = pnand %p146, %p147
      %p149 = pneg %p148
      // Predicated region
      $region9: #{tpu_custom_call.1} parent=5 // pred_check
        _
      $region10: #{tpu_custom_call.1} parent=5 // pred_check_branch
        %151 = sbr.rel (%p148) target = $region12
      $region11: #{tpu_custom_call.1} parent=5 // pred_region
        %s152 = ssub.s32 %s18, 1
      $region12: #{tpu_custom_call.1} parent=5 // pred_fallthru
        _
      %p153 = scmp.lt.s32.totalorder %s18, 2
      // Predicated region
      $region13: #{tpu_custom_call.1} parent=5 // pred_check
        %p154 = pneg %p153
      $region14: #{tpu_custom_call.1} parent=5 // pred_check_branch
        %156 = sbr.rel (%p154) target = $region16
      $region15: #{tpu_custom_call.1} parent=5 // pred_region
        // Predicated region
        $region17: #{tpu_custom_call.1} parent=15 // pred_check
          %p157 = pneg %p52
        $region18: #{tpu_custom_call.1} parent=15 // pred_check_branch
          %159 = sbr.rel (%p157) target = $region20
        $region19: #{tpu_custom_call.1} parent=15 // pred_region
          %s160 = sand.u32 %s42, 1
          %s161 = scalar_lea.sflag [#allocation3], %s160
          %s162 = sand.u32 %s42, 1
          %s163 = scalar_lea.vmem [#allocation2], %s162
          %s165 = ssub.s32 16, 16
          %166 = vsyncadd %s161, %s165
          %s167 = sadd.s32 %s26, %s25
          %s168 = smul.addr %s167, 16
          %s169 = scalar_lea.hbm %s0, %s168
          %s171 = sshll.u32 %s163, 4
          %s172 = int_to_ptr.vmem [resolvable:$true] %s171
          %174 = dma.hbm_to_vmem [thread:$0]  %s169, 16, %s172, %s161
        $region20: #{tpu_custom_call.1} parent=15 // pred_fallthru
          _
        // Predicated region
        $region21: #{tpu_custom_call.1} parent=15 // pred_check
          %p175 = pneg %p78
        $region22: #{tpu_custom_call.1} parent=15 // pred_check_branch
          %177 = sbr.rel (%p175) target = $region24
        $region23: #{tpu_custom_call.1} parent=15 // pred_region
          %s178 = sand.u32 %s68, 1
          %s179 = scalar_lea.sflag [#allocation6], %s178
          %s180 = sand.u32 %s68, 1
          %s181 = smul.addr %s180, 64
          %s182 = scalar_lea.vmem [#allocation5], %s181
          %s184 = ssub.s32 1024, 1024
          %185 = vsyncadd %s179, %s184
          %s186 = smul.addr %s25, 16
          %s187 = smul.addr %s186, 64
          %s188 = scalar_lea.hbm %s1, %s187
          %s189 = sshll.u32 %s182, 4
          %s190 = int_to_ptr.vmem [resolvable:$true] %s189
          %195 = dma.hbm_to_vmem [thread:$0]  %s188, 1024, %s190, %s179, 64, 64, 4
        $region24: #{tpu_custom_call.1} parent=15 // pred_fallthru
          _
        // Predicated region
        $region25: #{tpu_custom_call.1} parent=15 // pred_check
          %p196 = pneg %p104
        $region26: #{tpu_custom_call.1} parent=15 // pred_check_branch
          %198 = sbr.rel (%p196) target = $region28
        $region27: #{tpu_custom_call.1} parent=15 // pred_region
          %p199 = scmp.lt.s32.totalorder %s25, 1
          %s200 = scalar_select %p199, %s25, 1
          %s201 = scalar_lea.vmem %s2, %s200
        $region28: #{tpu_custom_call.1} parent=15 // pred_fallthru
          _
      $region16: #{tpu_custom_call.1} parent=5 // pred_fallthru
        _
      %p202 = scmp.le.s32.totalorder 1, %s18
      %p203 = scmp.lt.s32.totalorder %s18, 3
      %p204 = pnand %p202, %p203
      %p205 = pneg %p204
      // Predicated region
      $region29: #{tpu_custom_call.1} parent=5 // pred_check
        _
      $region30: #{tpu_custom_call.1} parent=5 // pred_check_branch
        %207 = sbr.rel (%p204) target = $region32
      $region31: #{tpu_custom_call.1} parent=5 // pred_region
        %s208 = ssub.s32 %s18, 1
        %s209 = sand.u32 %s45, 1
        %s210 = scalar_lea.sflag [#allocation3], %s209
        %s211 = sand.u32 %s45, 1
        %s212 = scalar_lea.vmem [#allocation2], %s211
        // Predicated region
        $region33: #{tpu_custom_call.1} parent=31 // pred_check
          %p213 = pneg %p58
        $region34: #{tpu_custom_call.1} parent=31 // pred_check_branch
          %215 = sbr.rel (%p213) target = $region36
        $region35: #{tpu_custom_call.1} parent=31 // pred_region
          %216 = dma.done %s210, 16
        $region36: #{tpu_custom_call.1} parent=31 // pred_fallthru
          _
        %s217 = sand.u32 %s71, 1
        %s218 = scalar_lea.sflag [#allocation6], %s217
        %s219 = sand.u32 %s71, 1
        %s220 = smul.addr %s219, 64
        %s221 = scalar_lea.vmem [#allocation5], %s220
        // Predicated region
        $region37: #{tpu_custom_call.1} parent=31 // pred_check
          %p222 = pneg %p84
        $region38: #{tpu_custom_call.1} parent=31 // pred_check_branch
          %224 = sbr.rel (%p222) target = $region40
        $region39: #{tpu_custom_call.1} parent=31 // pred_region
          %225 = dma.done %s218, 1024
        $region40: #{tpu_custom_call.1} parent=31 // pred_fallthru
          _
        %s226 = sand.u32 %s45, 1
        %s227 = scalar_lea.sflag [#allocation3], %s226
        %s228 = sand.u32 %s45, 1
        %s229 = scalar_lea.vmem [#allocation2], %s228
        %p230 = pneg %p58
        %p231 = pneg %p55
        %s232 = sand.u32 %s71, 1
        %s233 = scalar_lea.sflag [#allocation6], %s232
        %s234 = sand.u32 %s71, 1
        %s235 = smul.addr %s234, 64
        %s236 = scalar_lea.vmem [#allocation5], %s235
        %p237 = pneg %p84
        %p238 = pneg %p81
        %p239 = scmp.lt.s32.totalorder %s27, 1
        %s240 = scalar_select %p239, %s27, 1
        %s241 = scalar_lea.vmem %s2, %s240
        %p242 = pneg %p110
        %p243 = pneg %p107
        %p244 = pneg %p138
        %p245 = pneg %p135
        %s246 = sand.u32 %s125, 1
        %s247 = scalar_lea.sflag [#allocation4], %s246
        %s248 = sand.u32 %s125, 1
        %s249 = scalar_lea.vmem [#allocation7], %s248
        %p250 = scmp.lt.s32.totalorder %s27, 1
        %s251 = scalar_select %p250, %s27, 1
        %s252 = scalar_lea.vmem %s2, %s251
        %v254 = vld [vmem:[%s212] sm:$0x1]
        %v255 = vpack.c.bf16 %v254, %v254
        %v256 = vld [vmem:[%s221] sm:$0xf]
        %v257 = vld [vmem:[%s221 + $0x4] sm:$0xf]
        %v258 = vld [vmem:[%s221 + $0x8] sm:$0xf]
        %v259 = vld [vmem:[%s221 + $0xc] sm:$0xf]
        %v260 = vld [vmem:[%s221 + $0x10] sm:$0xf]
        %v261 = vld [vmem:[%s221 + $0x14] sm:$0xf]
        %v262 = vld [vmem:[%s221 + $0x18] sm:$0xf]
        %v263 = vld [vmem:[%s221 + $0x1c] sm:$0xf]
        %v264 = vld [vmem:[%s221 + $0x20] sm:$0xf]
        %v265 = vld [vmem:[%s221 + $0x24] sm:$0xf]
        %v266 = vld [vmem:[%s221 + $0x28] sm:$0xf]
        %v267 = vld [vmem:[%s221 + $0x2c] sm:$0xf]
        %v268 = vld [vmem:[%s221 + $0x30] sm:$0xf]
        %v269 = vld [vmem:[%s221 + $0x34] sm:$0xf]
        %v270 = vld [vmem:[%s221 + $0x38] sm:$0xf]
        %v271 = vld [vmem:[%s221 + $0x3c] sm:$0xf]
        %v272 = vld [vmem:[%s252] sm:$0x1]
        %v289 = vunpack.c.l.b16 %v256
        %v290 = vunpack.c.l.b16 %v257
        %v291 = vunpack.c.l.b16 %v258
        %v292 = vunpack.c.l.b16 %v259
        %v293 = vunpack.c.l.b16 %v260
        %v294 = vunpack.c.l.b16 %v261
        %v295 = vunpack.c.l.b16 %v262
        %v296 = vunpack.c.l.b16 %v263
        %v297 = vunpack.c.l.b16 %v264
        %v298 = vunpack.c.l.b16 %v265
        %v299 = vunpack.c.l.b16 %v266
        %v300 = vunpack.c.l.b16 %v267
        %v301 = vunpack.c.l.b16 %v268
        %v302 = vunpack.c.l.b16 %v269
        %v303 = vunpack.c.l.b16 %v270
        %v304 = vunpack.c.l.b16 %v271
        %v305 = vpack.c.b16 %v290, %v289
        %v306 = vpack.c.b16 %v292, %v291
        %v307 = vpack.c.b16 %v294, %v293
        %v308 = vpack.c.b16 %v296, %v295
        %v309 = vpack.c.b16 %v298, %v297
        %v310 = vpack.c.b16 %v300, %v299
        %v311 = vpack.c.b16 %v302, %v301
        %v312 = vpack.c.b16 %v304, %v303
        %321 = vmatprep.subr.bf16.mxu0 0
        %322 = vmatpush1.bf16.msra.mxu0 %v305
        %323 = vmatprep.subr.bf16.mxu0 0
        %324 = vmatpush1.bf16.msra.mxu0 %v306
        %325 = vmatprep.subr.bf16.mxu0 0
        %326 = vmatpush1.bf16.msra.mxu0 %v307
        %327 = vmatprep.subr.bf16.mxu0 0
        %328 = vmatpush1.bf16.msra.mxu0 %v308
        %329 = vmatprep.subr.bf16.mxu0 0
        %330 = vmatpush1.bf16.msra.mxu0 %v309
        %331 = vmatprep.subr.bf16.mxu0 0
        %332 = vmatpush1.bf16.msra.mxu0 %v310
        %333 = vmatprep.subr.bf16.mxu0 0
        %334 = vmatpush1.bf16.msra.mxu0 %v311
        %335 = vmatprep.subr.bf16.mxu0 0
        %336 = vmatpush1.bf16.msra.mxu0 %v312
        %337 = vmatprep.subr.bf16.mxu0 0
        %338 = vmatpush1.bf16.msra.mxu0 0
        %339 = vmatprep.subr.bf16.mxu0 0
        %340 = vmatpush1.bf16.msra.mxu0 0
        %341 = vmatprep.subr.bf16.mxu0 0
        %342 = vmatpush1.bf16.msra.mxu0 0
        %343 = vmatprep.subr.bf16.mxu0 0
        %344 = vmatpush1.bf16.msra.mxu0 0
        %345 = vmatprep.subr.bf16.mxu0 0
        %346 = vmatpush1.bf16.msra.mxu0 0
        %347 = vmatprep.subr.bf16.mxu0 0
        %348 = vmatpush1.bf16.msra.mxu0 0
        %349 = vmatprep.subr.bf16.mxu0 0
        %350 = vmatpush1.bf16.msra.mxu0 0
        %351 = vmatprep.subr.bf16.mxu0 0
        %352 = vmatpush1.bf16.msra.mxu0 0
        %353 = vmatprep.mubr.bf16.mxu0 0
        %354 = vmatmul.mubr.bf16.gmra.mrb[0].mxu0 %v255
        %v355 = vpop.f32.mrb[0].mxu0
        %v356 = vadd.f32 %v272, %v355
        %v357 = vpop.f32.mrb[0].mxu0
        %v358 = vpop.f32.mrb[0].mxu0
        %v359 = vpop.f32.mrb[0].mxu0
        %360 = vdwg.mxu0
        %361 = vst [vmem:[%s249] sm:$0x1] %v356
        %s362 = sand.u32 %s125, 1
        %s363 = scalar_lea.sflag [#allocation4], %s362
        %s364 = sand.u32 %s125, 1
        %s365 = scalar_lea.vmem [#allocation7], %s364
        // Predicated region
        $region41: #{tpu_custom_call.1} parent=31 // pred_check
          %p366 = pneg %p135
        $region42: #{tpu_custom_call.1} parent=31 // pred_check_branch
          %368 = sbr.rel (%p366) target = $region44
        $region43: #{tpu_custom_call.1} parent=31 // pred_region
          %s370 = ssub.s32 16, 16
          %371 = vsyncadd %s363, %s370
          %s372 = sadd.s32 %s28, %s27
          %s373 = smul.addr %s372, 16
          %s374 = scalar_lea.hbm %s3, %s373
          %s376 = sshll.u32 %s365, 4
          %s377 = int_to_ptr.vmem [resolvable:$true] %s376
          %379 = dma.vmem_to_hbm [thread:$0]  %s377, 16, %s374, %s363
        $region44: #{tpu_custom_call.1} parent=31 // pred_fallthru
          _
      $region32: #{tpu_custom_call.1} parent=5 // pred_fallthru
        _
      %p380 = scmp.le.s32.totalorder 2, %s18
      // Predicated region
      $region45: #{tpu_custom_call.1} parent=5 // pred_check
        %p381 = pneg %p380
      $region46: #{tpu_custom_call.1} parent=5 // pred_check_branch
        %383 = sbr.rel (%p381) target = $region48
      $region47: #{tpu_custom_call.1} parent=5 // pred_region
        %s384 = ssub.s32 %s18, 2
        // Predicated region
        $region49: #{tpu_custom_call.1} parent=47 // pred_check
          %p385 = pneg %p141
        $region50: #{tpu_custom_call.1} parent=47 // pred_check_branch
          %387 = sbr.rel (%p385) target = $region52
        $region51: #{tpu_custom_call.1} parent=47 // pred_region
          %s388 = sand.u32 %s126, 1
          %s389 = scalar_lea.sflag [#allocation4], %s388
          %s390 = sand.u32 %s126, 1
          %s391 = scalar_lea.vmem [#allocation7], %s390
          %392 = dma.done %s389, 16
        $region52: #{tpu_custom_call.1} parent=47 // pred_fallthru
          _
      $region48: #{tpu_custom_call.1} parent=5 // pred_fallthru
        _
    $region6: #{tpu_custom_call.1} parent=1 // loop_footer
      %s22 = sadd.s32 1, %s18
    $region7: #{tpu_custom_call.1} parent=1 // loop_footer_branch
      %17 = sbr.rel target = $region3
    $region8: #{tpu_custom_call.1} parent=1 // loop_exit
      _
    %393 = vsyncpa [#allocation3], 1
    %s394 = scalar_lea.sflag [#allocation3], 1
    %395 = vsyncpa %s394, 1
    %396 = vsyncpa [#allocation6], 1
    %s397 = scalar_lea.sflag [#allocation6], 1
    %398 = vsyncpa %s397, 1
    %399 = vsyncpa [#allocation4], 1
    %s400 = scalar_lea.sflag [#allocation4], 1
    %401 = vsyncpa %s400, 1

</llo_original>
